<compile_context>
chip_gen: v5e
topology: v5e:2x2
jax: 0.10.0
libtpu: 0.0.40
codegen_flags: <defaults>
</compile_context>

<pallas_src>
import jax
import jax.numpy as jnp
from jax.experimental import pallas as pl
from jax.experimental.pallas import tpu as pltpu

LANE = 128        # vreg lane width / MXU alignment
ROW_ALIGN = 16    # bf16 packs 16 rows per vreg


def _round_up(n, m):
    return ((n + m - 1) // m) * m


def _choose_tiling(batch, max_tile=512):
    """Pick (tm, b_pad).

    Guarantees an even number (>= 2) of batch tiles whenever the batch is big
    enough to amortize per-step overhead (so DMA pipelines and v7x's second
    TensorCore gets work), keeps tiles <= max_tile rows, and rounds everything
    to multiples of 16 for bf16 sublane packing.
    """
    b16 = _round_up(max(batch, 1), ROW_ALIGN)
    if b16 <= 2 * ROW_ALIGN:
        # Tiny batch: a single tile; splitting would be pure per-step overhead.
        return b16, b16
    n_tiles = max(2, 2 * pl.cdiv(b16, 2 * max_tile))      # even, >= 2
    tm = _round_up(pl.cdiv(b16, n_tiles), ROW_ALIGN)       # <= max_tile
    b_pad = _round_up(b16, tm)                             # grid = b_pad // tm
    return tm, b_pad


def mlp_kernel(x_ref, w1_ref, b1_ref, w2_ref, b2_ref, w3_ref, b3_ref, o_ref):
    """Fused 3-layer MLP tile: 3 bf16 MXU matmuls (f32 accumulate) + f32 VPU
    bias/ReLU epilogues, bf16 lane-dense output store."""
    x = x_ref[...].astype(jnp.bfloat16)            # no-op if x already bf16

    h1 = jnp.dot(x, w1_ref[...], preferred_element_type=jnp.float32)
    h1 = jnp.maximum(h1 + b1_ref[...], 0.0)        # bias + ReLU in f32

    h2 = jnp.dot(h1.astype(jnp.bfloat16), w2_ref[...],
                 preferred_element_type=jnp.float32)
    h2 = jnp.maximum(h2 + b2_ref[...], 0.0)

    out = jnp.dot(h2.astype(jnp.bfloat16), w3_ref[...],
                  preferred_element_type=jnp.float32)
    o_ref[...] = (out + b3_ref[...]).astype(o_ref.dtype)   # bf16 store


def prepare_params(w1, b1, w2, b2, w3, b3):
    """One-time parameter prep: pad hidden/class dims to 128, bf16 weights,
    (1, N) f32 bias rows."""
    in_size, hidden = w1.shape
    num_classes = w3.shape[1]
    h_pad = _round_up(hidden, LANE)
    c_pad = _round_up(num_classes, LANE)

    def pad2(a, rows, cols):
        return jnp.pad(a, ((0, rows - a.shape[0]), (0, cols - a.shape[1])))

    w1p = pad2(w1, in_size, h_pad).astype(jnp.bfloat16)
    w2p = pad2(w2, h_pad, h_pad).astype(jnp.bfloat16)
    w3p = pad2(w3, h_pad, c_pad).astype(jnp.bfloat16)
    b1p = pad2(b1.reshape(1, -1), 1, h_pad).astype(jnp.float32)
    b2p = pad2(b2.reshape(1, -1), 1, h_pad).astype(jnp.float32)
    b3p = pad2(b3.reshape(1, -1), 1, c_pad).astype(jnp.float32)
    return (w1p, b1p, w2p, b2p, w3p, b3p), num_classes


def _vmem_estimate(tm, K, h_pad, c_pad, x_itemsize, params):
    """Conservative VMEM footprint: double-buffered x/out tiles + (double-
    buffered) resident params + in-kernel f32/bf16 intermediates."""
    param_bytes = sum(a.size * a.dtype.itemsize for a in params)
    x_tile = tm * K * x_itemsize
    out_tile = tm * c_pad * 2                       # bf16 output tile
    inter = tm * h_pad * (4 + 2) * 2 + tm * c_pad * 4
    return 2 * (x_tile + out_tile + param_bytes) + inter


def neural_net_forward(x, padded_params, num_classes):
    """x: (B, input_size) float32 or bfloat16 -> (B, num_classes) float32."""
    w1p, b1p, w2p, b2p, w3p, b3p = padded_params
    B, K = x.shape
    h_pad = w1p.shape[1]
    c_pad = w3p.shape[1]

    tm, b_pad = _choose_tiling(B)
    if b_pad != B:
        x = jnp.pad(x, ((0, b_pad - B), (0, 0)))
    grid = (b_pad // tm,)

    const = lambda a: pl.BlockSpec(a.shape, lambda i: (0, 0))  # VMEM-resident

    flops = 2 * b_pad * (K * h_pad + h_pad * h_pad + h_pad * c_pad)
    bytes_accessed = (
        x.size * x.dtype.itemsize
        + sum(a.size * a.dtype.itemsize for a in padded_params)
        + b_pad * c_pad * 2                         # bf16 output stream
    )
    vmem_limit = int(min(
        max(2 * _vmem_estimate(tm, K, h_pad, c_pad, x.dtype.itemsize,
                               padded_params), 32 << 20),
        64 << 20))

    out = pl.pallas_call(
        mlp_kernel,
        out_shape=jax.ShapeDtypeStruct((b_pad, c_pad), jnp.bfloat16),
        grid=grid,
        in_specs=[
            pl.BlockSpec((tm, K), lambda i: (i, 0)),   # x tiles over batch
            const(w1p), const(b1p),                    # weights stay resident
            const(w2p), const(b2p),
            const(w3p), const(b3p),
        ],
        out_specs=pl.BlockSpec((tm, c_pad), lambda i: (i, 0)),  # lane-dense
        compiler_params=pltpu.CompilerParams(
            dimension_semantics=("parallel",),         # 2-TC sharding on v7x
            vmem_limit_bytes=vmem_limit),
        cost_estimate=pl.CostEstimate(
            flops=flops, transcendentals=0, bytes_accessed=bytes_accessed),
    )(x, w1p, b1p, w2p, b2p, w3p, b3p)

    # Slice the small logical result, then widen — the widening touches only
    # (B, num_classes) elements, never the padded (b_pad, c_pad) buffer.
    return out[:B, :num_classes].astype(jnp.float32)


def reference_forward(x, w1, b1, w2, b2, w3, b3):
    h1 = jnp.maximum(x @ w1 + b1, 0.0)
    h2 = jnp.maximum(h1 @ w2 + b2, 0.0)
    return h2 @ w3 + b3


if __name__ == "__main__":
    # Small shapes consistent with the module's forward: 2-D (batch, input_size).
    # batch=48 exercises the multi-step (grid=2), row-padded path.
    batch, input_size, hidden_size, num_classes = 48, 32, 64, 10

    key = jax.random.PRNGKey(0)
    kx, k1, k2, k3, kb1, kb2, kb3 = jax.random.split(key, 7)

    x = jax.random.normal(kx, (batch, input_size), dtype=jnp.float32)

    # Deterministic PyTorch-style init: uniform(-1/sqrt(fan_in), +1/sqrt(fan_in)).
    def init_linear(kw, kb, fan_in, fan_out):
        bound = 1.0 / (fan_in ** 0.5)
        w = jax.random.uniform(kw, (fan_in, fan_out), jnp.float32, -bound, bound)
        b = jax.random.uniform(kb, (fan_out,), jnp.float32, -bound, bound)
        return w, b

    w1, b1 = init_linear(k1, kb1, input_size, hidden_size)
    w2, b2 = init_linear(k2, kb2, hidden_size, hidden_size)
    w3, b3 = init_linear(k3, kb3, hidden_size, num_classes)

    padded_params, nc = prepare_params(w1, b1, w2, b2, w3, b3)

    out = neural_net_forward(x, padded_params, nc)
    out = jax.block_until_ready(out)

    ref = reference_forward(x, w1, b1, w2, b2, w3, b3)
    assert out.shape == (batch, num_classes)
    # bf16 matmul inputs + bf16 output store, f32 accumulation -> small error.
    assert jnp.allclose(out, ref, atol=3e-2, rtol=3e-2), (
        float(jnp.max(jnp.abs(out - ref))))

    print("KERNEL_OK")
</pallas_src>

<mosaic_0001>
module attributes {stable_mosaic.version = 11 : i64} {
  func.func @mlp_kernel(%arg0: i32, %arg1: memref<32x32xf32, #tpu.memory_space<vmem>>, %arg2: memref<32x128xbf16, #tpu.memory_space<vmem>>, %arg3: memref<1x128xf32, #tpu.memory_space<vmem>>, %arg4: memref<128x128xbf16, #tpu.memory_space<vmem>>, %arg5: memref<1x128xf32, #tpu.memory_space<vmem>>, %arg6: memref<128x128xbf16, #tpu.memory_space<vmem>>, %arg7: memref<1x128xf32, #tpu.memory_space<vmem>>, %arg8: memref<32x128xbf16, #tpu.memory_space<vmem>>) attributes {dimension_semantics = [#tpu.dimension_semantics<parallel>], iteration_bounds = array<i64: 2>, scalar_prefetch = 0 : i64, scratch_operands = 0 : i64, tpu.core_type = #tpu.core_type<tc>, window_params = [{transform_indices = @transform_0, window_bounds = array<i64: 32, 32>}, {pipeline_mode = #tpu.pipeline_mode<synchronous>, transform_indices = @transform_1, window_bounds = array<i64: 32, 128>}, {pipeline_mode = #tpu.pipeline_mode<synchronous>, transform_indices = @transform_2, window_bounds = array<i64: 1, 128>}, {pipeline_mode = #tpu.pipeline_mode<synchronous>, transform_indices = @transform_3, window_bounds = array<i64: 128, 128>}, {pipeline_mode = #tpu.pipeline_mode<synchronous>, transform_indices = @transform_4, window_bounds = array<i64: 1, 128>}, {pipeline_mode = #tpu.pipeline_mode<synchronous>, transform_indices = @transform_5, window_bounds = array<i64: 128, 128>}, {pipeline_mode = #tpu.pipeline_mode<synchronous>, transform_indices = @transform_6, window_bounds = array<i64: 1, 128>}, {transform_indices = @transform_7, window_bounds = array<i64: 32, 128>}]} {
    %c0 = arith.constant 0 : index
    %c0_0 = arith.constant 0 : index
    %0 = vector.load %arg1[%c0, %c0_0] : memref<32x32xf32, #tpu.memory_space<vmem>>, vector<32x32xf32>
    %1 = arith.truncf %0 : vector<32x32xf32> to vector<32x32xbf16>
    %c0_1 = arith.constant 0 : index
    %c0_2 = arith.constant 0 : index
    %2 = vector.load %arg2[%c0_1, %c0_2] : memref<32x128xbf16, #tpu.memory_space<vmem>>, vector<32x128xbf16>
    %cst = arith.constant dense<0.000000e+00> : vector<32x128xf32>
    %3 = tpu.matmul %1, %2, %cst {dimension_numbers = #tpu.dot_dimension_numbers<[1], [0], [0], [1], [0, 0, 1, 1], [], []>} : vector<32x32xbf16>, vector<32x128xbf16>, vector<32x128xf32> -> vector<32x128xf32>
    %c0_3 = arith.constant 0 : index
    %c0_4 = arith.constant 0 : index
    %4 = vector.load %arg3[%c0_3, %c0_4] : memref<1x128xf32, #tpu.memory_space<vmem>>, vector<1x128xf32>
    %5 = vector.broadcast %4 : vector<1x128xf32> to vector<32x128xf32>
    %6 = arith.addf %3, %5 : vector<32x128xf32>
    %cst_5 = arith.constant 0.000000e+00 : f32
    %7 = vector.broadcast %cst_5 : f32 to vector<32x128xf32>
    %8 = arith.maximumf %6, %7 : vector<32x128xf32>
    %9 = arith.truncf %8 : vector<32x128xf32> to vector<32x128xbf16>
    %c0_6 = arith.constant 0 : index
    %c0_7 = arith.constant 0 : index
    %10 = vector.load %arg4[%c0_6, %c0_7] : memref<128x128xbf16, #tpu.memory_space<vmem>>, vector<128x128xbf16>
    %cst_8 = arith.constant dense<0.000000e+00> : vector<32x128xf32>
    %11 = tpu.matmul %9, %10, %cst_8 {dimension_numbers = #tpu.dot_dimension_numbers<[1], [0], [0], [1], [0, 0, 1, 1], [], []>} : vector<32x128xbf16>, vector<128x128xbf16>, vector<32x128xf32> -> vector<32x128xf32>
    %c0_9 = arith.constant 0 : index
    %c0_10 = arith.constant 0 : index
    %12 = vector.load %arg5[%c0_9, %c0_10] : memref<1x128xf32, #tpu.memory_space<vmem>>, vector<1x128xf32>
    %13 = vector.broadcast %12 : vector<1x128xf32> to vector<32x128xf32>
    %14 = arith.addf %11, %13 : vector<32x128xf32>
    %cst_11 = arith.constant 0.000000e+00 : f32
    %15 = vector.broadcast %cst_11 : f32 to vector<32x128xf32>
    %16 = arith.maximumf %14, %15 : vector<32x128xf32>
    %17 = arith.truncf %16 : vector<32x128xf32> to vector<32x128xbf16>
    %c0_12 = arith.constant 0 : index
    %c0_13 = arith.constant 0 : index
    %18 = vector.load %arg6[%c0_12, %c0_13] : memref<128x128xbf16, #tpu.memory_space<vmem>>, vector<128x128xbf16>
    %cst_14 = arith.constant dense<0.000000e+00> : vector<32x128xf32>
    %19 = tpu.matmul %17, %18, %cst_14 {dimension_numbers = #tpu.dot_dimension_numbers<[1], [0], [0], [1], [0, 0, 1, 1], [], []>} : vector<32x128xbf16>, vector<128x128xbf16>, vector<32x128xf32> -> vector<32x128xf32>
    %c0_15 = arith.constant 0 : index
    %c0_16 = arith.constant 0 : index
    %20 = vector.load %arg7[%c0_15, %c0_16] : memref<1x128xf32, #tpu.memory_space<vmem>>, vector<1x128xf32>
    %21 = vector.broadcast %20 : vector<1x128xf32> to vector<32x128xf32>
    %22 = arith.addf %19, %21 : vector<32x128xf32>
    %23 = arith.truncf %22 : vector<32x128xf32> to vector<32x128xbf16>
    %c0_17 = arith.constant 0 : index
    %c0_18 = arith.constant 0 : index
    %24 = vector.load %arg8[%c0_17, %c0_18] : memref<32x128xbf16, #tpu.memory_space<vmem>>, vector<32x128xbf16>
    tpu.vector_store %arg8[%c0_17, %c0_18], %23 {strides = array<i32>} : memref<32x128xbf16, #tpu.memory_space<vmem>>, vector<32x128xbf16>,
    return
  }
  func.func @transform_0(%arg0: i32) -> (i32, i32) {
    %c0_i32 = arith.constant 0 : i32
    %c0_i32_0 = arith.constant 0 : i32
    return %arg0, %c0_i32 : i32, i32
  }
  func.func @transform_1(%arg0: i32) -> (i32, i32) {
    %c0_i32 = arith.constant 0 : i32
    %c0_i32_0 = arith.constant 0 : i32
    %c0_i32_1 = arith.constant 0 : i32
    return %c0_i32, %c0_i32_0 : i32, i32
  }
  func.func @transform_2(%arg0: i32) -> (i32, i32) {
    %c0_i32 = arith.constant 0 : i32
    %c0_i32_0 = arith.constant 0 : i32
    %c0_i32_1 = arith.constant 0 : i32
    return %c0_i32, %c0_i32_0 : i32, i32
  }
  func.func @transform_3(%arg0: i32) -> (i32, i32) {
    %c0_i32 = arith.constant 0 : i32
    %c0_i32_0 = arith.constant 0 : i32
    %c0_i32_1 = arith.constant 0 : i32
    return %c0_i32, %c0_i32_0 : i32, i32
  }
  func.func @transform_4(%arg0: i32) -> (i32, i32) {
    %c0_i32 = arith.constant 0 : i32
    %c0_i32_0 = arith.constant 0 : i32
    %c0_i32_1 = arith.constant 0 : i32
    return %c0_i32, %c0_i32_0 : i32, i32
  }
  func.func @transform_5(%arg0: i32) -> (i32, i32) {
    %c0_i32 = arith.constant 0 : i32
    %c0_i32_0 = arith.constant 0 : i32
    %c0_i32_1 = arith.constant 0 : i32
    return %c0_i32, %c0_i32_0 : i32, i32
  }
  func.func @transform_6(%arg0: i32) -> (i32, i32) {
    %c0_i32 = arith.constant 0 : i32
    %c0_i32_0 = arith.constant 0 : i32
    %c0_i32_1 = arith.constant 0 : i32
    return %c0_i32, %c0_i32_0 : i32, i32
  }
  func.func @transform_7(%arg0: i32) -> (i32, i32) {
    %c0_i32 = arith.constant 0 : i32
    %c0_i32_0 = arith.constant 0 : i32
    return %arg0, %c0_i32 : i32, i32
  }
}

</mosaic_0001>

<llo_original>
// kernel: tpu_custom_call.1
$region0: #{tpu_custom_call.1}
  #allocation0 [shape = 'u32[]', space=smem, size = 0x4, offset = 0x4, fixed_abs, tag = 'smem constant byte address 0x4 - core index']
  #allocation1 [shape = 'u32[72,128]{1,0:T(1,128)}', space=vmem, size = 0x9000, scoped, tag = 'internal scratch']
  %s0 = inlined_call_operand.vmem [shape: f32[64,32], index: 0, kind: input, shape index: {}]
  %s1 = inlined_call_operand.vmem [shape: bf16[32,128], index: 1, kind: input, shape index: {}]
  %s2 = inlined_call_operand.vmem [shape: f32[1,128], index: 2, kind: input, shape index: {}]
  %s3 = inlined_call_operand.vmem [shape: bf16[128,128], index: 3, kind: input, shape index: {}]
  %s4 = inlined_call_operand.vmem [shape: f32[1,128], index: 4, kind: input, shape index: {}]
  %s5 = inlined_call_operand.hbm [shape: bf16[128,128], index: 5, kind: input, shape index: {}]
  %s6 = inlined_call_operand.vmem [shape: f32[1,128], index: 6, kind: input, shape index: {}]
  %s7 = inlined_call_operand.hbm [shape: bf16[64,128], index: 7, kind: output, shape index: {}]
  %s8 = sld [smem:[#allocation0]]
  $region65: #{tpu_custom_call.1} parent=0
    _
  %s10 = ssub.s32 1, %s8
  %s11 = scalar_select 0, %s10, %s8
  $region1: #{tpu_custom_call.1} parent=0
    #allocation2 [shape = 'u8[32768]{0}', space=vmem, size = 0x8000, scoped, tag = 'input window, operand 5, single buffered']
    #allocation3 [shape = 's32[2]{0}', space=sflag, size = 0x8, scoped, tag = 'scoped memory for tpu_custom_call.1']
    #allocation4 [shape = 's32[2]{0}', space=sflag, size = 0x8, scoped, tag = 'scoped memory for tpu_custom_call.1']
    #allocation5 [shape = 'u8[16384]{0}', space=vmem, size = 0x4000, scoped, tag = 'output window, operand 0']
    %12 = vsyncpa [#allocation3], 0
    %13 = vsyncpa [#allocation4], 0
    %s14 = scalar_lea.sflag [#allocation4], 1
    %15 = vsyncpa %s14, 0
    loop: start=0, step=1, limit=4
    $region2: #{tpu_custom_call.1} parent=1 // loop_pre_header
      _
    $region3: #{tpu_custom_call.1} parent=1 // loop_header
      %s17 = sphi 0, %s21
      %p18 = scmp.ge.s32.totalorder %s17, 4
      %s27 = sphi 0, %s29
      %s30 = sphi 0, %s27
      %s31 = sphi 0, %s30
      %s47 = sphi 0, %s31
      %s51 = sphi 0, %s51
      %s53 = sphi 0, %s51
      %s54 = sphi 0, %s53
      %s68 = sphi 0, %s54
      %s72 = sphi 0, %s72
      %s74 = sphi 0, %s72
      %s75 = sphi 0, %s74
      %s89 = sphi 0, %s75
      %s93 = sphi 0, %s93
      %s95 = sphi 0, %s93
      %s96 = sphi 0, %s95
      %s110 = sphi 0, %s96
      %s114 = sphi 0, %s114
      %s116 = sphi 0, %s114
      %s117 = sphi 0, %s116
      %s131 = sphi 0, %s117
      %s135 = sphi 0, %s135
      %s137 = sphi 0, %s135
      %s138 = sphi 0, %s137
      %s152 = sphi 0, %s138
      %s156 = sphi 0, %s156
      %s158 = sphi 0, %s156
      %s159 = sphi 0, %s158
      %s173 = sphi 0, %s159
      %s179 = sphi 0, %s181
      %s182 = sphi 0, %s179
      %s183 = sphi 0, %s182
      %s199 = sphi 0, %s183
    $region4: #{tpu_custom_call.1} parent=1 // loop_header_branch
      %20 = sbr.rel (%p18) target = $region8
    $region5: #{tpu_custom_call.1} parent=1 // loop_body
      %s22 = ssub.s32 %s17, 1
      %s23 = ssub.s32 %s17, 2
      %s24 = sadd.s32 %s17, 1
      %s25 = ssub.s32 %s17, %s24
      %p26 = scmp.eq.s32.totalorder %s25, 0
      %s28 = sadd.s32 %s27, 1
      %s29 = scalar_select %p26, %s27, %s28
      %p32 = pneg %p26
      %p33 = scmp.eq.s32.totalorder %s17, 1
      %p34 = por %p32, %p33
      %p35 = scmp.ne.s32.totalorder %s27, %s30
      %p36 = scmp.eq.s32.totalorder %s17, 0
      %p37 = por %p35, %p36
      %p38 = scmp.ne.s32.totalorder %s27, %s30
      %p39 = scmp.eq.s32.totalorder %s22, 1
      %p40 = por %p38, %p39
      %p41 = scmp.ne.s32.totalorder %s30, %s31
      %p42 = scmp.eq.s32.totalorder %s22, 0
      %p43 = por %p41, %p42
      %p44 = scmp.ne.s32.totalorder %s30, %s31
      %p45 = scmp.eq.s32.totalorder %s23, 1
      %p46 = por %p44, %p45
      %p48 = scmp.ne.s32.totalorder %s31, %s47
      %p49 = scmp.eq.s32.totalorder %s23, 0
      %p50 = por %p48, %p49
      %s52 = sadd.s32 %s51, 1
      %p55 = scmp.eq.s32.totalorder %s17, 1
      %p56 = scmp.ne.s32.totalorder %s51, %s53
      %p57 = scmp.eq.s32.totalorder %s17, 0
      %p58 = por %p56, %p57
      %p59 = scmp.ne.s32.totalorder %s51, %s53
      %p60 = scmp.eq.s32.totalorder %s22, 1
      %p61 = por %p59, %p60
      %p62 = scmp.ne.s32.totalorder %s53, %s54
      %p63 = scmp.eq.s32.totalorder %s22, 0
      %p64 = por %p62, %p63
      %p65 = scmp.ne.s32.totalorder %s53, %s54
      %p66 = scmp.eq.s32.totalorder %s23, 1
      %p67 = por %p65, %p66
      %p69 = scmp.ne.s32.totalorder %s54, %s68
      %p70 = scmp.eq.s32.totalorder %s23, 0
      %p71 = por %p69, %p70
      %s73 = sadd.s32 %s72, 1
      %p76 = scmp.eq.s32.totalorder %s17, 1
      %p77 = scmp.ne.s32.totalorder %s72, %s74
      %p78 = scmp.eq.s32.totalorder %s17, 0
      %p79 = por %p77, %p78
      %p80 = scmp.ne.s32.totalorder %s72, %s74
      %p81 = scmp.eq.s32.totalorder %s22, 1
      %p82 = por %p80, %p81
      %p83 = scmp.ne.s32.totalorder %s74, %s75
      %p84 = scmp.eq.s32.totalorder %s22, 0
      %p85 = por %p83, %p84
      %p86 = scmp.ne.s32.totalorder %s74, %s75
      %p87 = scmp.eq.s32.totalorder %s23, 1
      %p88 = por %p86, %p87
      %p90 = scmp.ne.s32.totalorder %s75, %s89
      %p91 = scmp.eq.s32.totalorder %s23, 0
      %p92 = por %p90, %p91
      %s94 = sadd.s32 %s93, 1
      %p97 = scmp.eq.s32.totalorder %s17, 1
      %p98 = scmp.ne.s32.totalorder %s93, %s95
      %p99 = scmp.eq.s32.totalorder %s17, 0
      %p100 = por %p98, %p99
      %p101 = scmp.ne.s32.totalorder %s93, %s95
      %p102 = scmp.eq.s32.totalorder %s22, 1
      %p103 = por %p101, %p102
      %p104 = scmp.ne.s32.totalorder %s95, %s96
      %p105 = scmp.eq.s32.totalorder %s22, 0
      %p106 = por %p104, %p105
      %p107 = scmp.ne.s32.totalorder %s95, %s96
      %p108 = scmp.eq.s32.totalorder %s23, 1
      %p109 = por %p107, %p108
      %p111 = scmp.ne.s32.totalorder %s96, %s110
      %p112 = scmp.eq.s32.totalorder %s23, 0
      %p113 = por %p111, %p112
      %s115 = sadd.s32 %s114, 1
      %p118 = scmp.eq.s32.totalorder %s17, 1
      %p119 = scmp.ne.s32.totalorder %s114, %s116
      %p120 = scmp.eq.s32.totalorder %s17, 0
      %p121 = por %p119, %p120
      %p122 = scmp.ne.s32.totalorder %s114, %s116
      %p123 = scmp.eq.s32.totalorder %s22, 1
      %p124 = por %p122, %p123
      %p125 = scmp.ne.s32.totalorder %s116, %s117
      %p126 = scmp.eq.s32.totalorder %s22, 0
      %p127 = por %p125, %p126
      %p128 = scmp.ne.s32.totalorder %s116, %s117
      %p129 = scmp.eq.s32.totalorder %s23, 1
      %p130 = por %p128, %p129
      %p132 = scmp.ne.s32.totalorder %s117, %s131
      %p133 = scmp.eq.s32.totalorder %s23, 0
      %p134 = por %p132, %p133
      %s136 = sadd.s32 %s135, 1
      %p139 = scmp.eq.s32.totalorder %s17, 1
      %p140 = scmp.ne.s32.totalorder %s135, %s137
      %p141 = scmp.eq.s32.totalorder %s17, 0
      %p142 = por %p140, %p141
      %p143 = scmp.ne.s32.totalorder %s135, %s137
      %p144 = scmp.eq.s32.totalorder %s22, 1
      %p145 = por %p143, %p144
      %p146 = scmp.ne.s32.totalorder %s137, %s138
      %p147 = scmp.eq.s32.totalorder %s22, 0
      %p148 = por %p146, %p147
      %p149 = scmp.ne.s32.totalorder %s137, %s138
      %p150 = scmp.eq.s32.totalorder %s23, 1
      %p151 = por %p149, %p150
      %p153 = scmp.ne.s32.totalorder %s138, %s152
      %p154 = scmp.eq.s32.totalorder %s23, 0
      %p155 = por %p153, %p154
      %s157 = sadd.s32 %s156, 1
      %p160 = scmp.eq.s32.totalorder %s17, 1
      %p161 = scmp.ne.s32.totalorder %s156, %s158
      %p162 = scmp.eq.s32.totalorder %s17, 0
      %p163 = por %p161, %p162
      %p164 = scmp.ne.s32.totalorder %s156, %s158
      %p165 = scmp.eq.s32.totalorder %s22, 1
      %p166 = por %p164, %p165
      %p167 = scmp.ne.s32.totalorder %s158, %s159
      %p168 = scmp.eq.s32.totalorder %s22, 0
      %p169 = por %p167, %p168
      %p170 = scmp.ne.s32.totalorder %s158, %s159
      %p171 = scmp.eq.s32.totalorder %s23, 1
      %p172 = por %p170, %p171
      %p174 = scmp.ne.s32.totalorder %s159, %s173
      %p175 = scmp.eq.s32.totalorder %s23, 0
      %p176 = por %p174, %p175
      %s177 = ssub.s32 %s17, %s24
      %p178 = scmp.eq.s32.totalorder %s177, 0
      %s180 = sadd.s32 %s179, 1
      %s181 = scalar_select %p178, %s179, %s180
      %p184 = pneg %p178
      %p185 = scmp.eq.s32.totalorder %s17, 1
      %p186 = por %p184, %p185
      %p187 = scmp.ne.s32.totalorder %s179, %s182
      %p188 = scmp.eq.s32.totalorder %s17, 0
      %p189 = por %p187, %p188
      %p190 = scmp.ne.s32.totalorder %s179, %s182
      %p191 = scmp.eq.s32.totalorder %s22, 1
      %p192 = por %p190, %p191
      %p193 = scmp.ne.s32.totalorder %s182, %s183
      %p194 = scmp.eq.s32.totalorder %s22, 0
      %p195 = por %p193, %p194
      %p196 = scmp.ne.s32.totalorder %s182, %s183
      %p197 = scmp.eq.s32.totalorder %s23, 1
      %p198 = por %p196, %p197
      %p200 = scmp.ne.s32.totalorder %s183, %s199
      %p201 = scmp.eq.s32.totalorder %s23, 0
      %p202 = por %p200, %p201
      %p203 = scmp.le.s32.totalorder 1, %s17
      %p204 = scmp.lt.s32.totalorder %s17, 3
      %p205 = pnand %p203, %p204
      %p206 = pneg %p205
      // Predicated region
      $region9: #{tpu_custom_call.1} parent=5 // pred_check
        _
      $region10: #{tpu_custom_call.1} parent=5 // pred_check_branch
        %208 = sbr.rel (%p205) target = $region12
      $region11: #{tpu_custom_call.1} parent=5 // pred_region
        %s209 = ssub.s32 %s17, 1
        // Predicated region
        $region13: #{tpu_custom_call.1} parent=11 // pred_check
          %p210 = pneg %p64
        $region14: #{tpu_custom_call.1} parent=11 // pred_check_branch
          %212 = sbr.rel (%p210) target = $region16
        $region15: #{tpu_custom_call.1} parent=11 // pred_region
          _
        $region16: #{tpu_custom_call.1} parent=11 // pred_fallthru
          _
        // Predicated region
        $region17: #{tpu_custom_call.1} parent=11 // pred_check
          %p213 = pneg %p85
        $region18: #{tpu_custom_call.1} parent=11 // pred_check_branch
          %215 = sbr.rel (%p213) target = $region20
        $region19: #{tpu_custom_call.1} parent=11 // pred_region
          _
        $region20: #{tpu_custom_call.1} parent=11 // pred_fallthru
          _
        // Predicated region
        $region21: #{tpu_custom_call.1} parent=11 // pred_check
          %p216 = pneg %p106
        $region22: #{tpu_custom_call.1} parent=11 // pred_check_branch
          %218 = sbr.rel (%p216) target = $region24
        $region23: #{tpu_custom_call.1} parent=11 // pred_region
          _
        $region24: #{tpu_custom_call.1} parent=11 // pred_fallthru
          _
        // Predicated region
        $region25: #{tpu_custom_call.1} parent=11 // pred_check
          %p219 = pneg %p127
        $region26: #{tpu_custom_call.1} parent=11 // pred_check_branch
          %221 = sbr.rel (%p219) target = $region28
        $region27: #{tpu_custom_call.1} parent=11 // pred_region
          _
        $region28: #{tpu_custom_call.1} parent=11 // pred_fallthru
          _
        // Predicated region
        $region29: #{tpu_custom_call.1} parent=11 // pred_check
          %p222 = pneg %p148
        $region30: #{tpu_custom_call.1} parent=11 // pred_check_branch
          %224 = sbr.rel (%p222) target = $region32
        $region31: #{tpu_custom_call.1} parent=11 // pred_region
          %226 = vsyncadd [#allocation3], 0
          %s227 = sshll.u32 %s5, 4
          %s228 = int_to_ptr.hbm [resolvable:$true] %s227
          %s229 = sshll.u32 [#allocation2], 4
          %s230 = int_to_ptr.vmem [resolvable:$true] %s229
          %235 = dma.hbm_to_vmem [thread:$0]  %s228, 1024, %s230, [#allocation3], 64, 64, 4
        $region32: #{tpu_custom_call.1} parent=11 // pred_fallthru
          _
        // Predicated region
        $region33: #{tpu_custom_call.1} parent=11 // pred_check
          %p236 = pneg %p169
        $region34: #{tpu_custom_call.1} parent=11 // pred_check_branch
          %238 = sbr.rel (%p236) target = $region36
        $region35: #{tpu_custom_call.1} parent=11 // pred_region
          _
        $region36: #{tpu_custom_call.1} parent=11 // pred_fallthru
          _
      $region12: #{tpu_custom_call.1} parent=5 // pred_fallthru
        _
      %p239 = scmp.lt.s32.totalorder %s17, 2
      // Predicated region
      $region37: #{tpu_custom_call.1} parent=5 // pred_check
        %p240 = pneg %p239
      $region38: #{tpu_custom_call.1} parent=5 // pred_check_branch
        %242 = sbr.rel (%p240) target = $region40
      $region39: #{tpu_custom_call.1} parent=5 // pred_region
        // Predicated region
        $region41: #{tpu_custom_call.1} parent=39 // pred_check
          %p243 = pneg %p37
        $region42: #{tpu_custom_call.1} parent=39 // pred_check_branch
          %245 = sbr.rel (%p243) target = $region44
        $region43: #{tpu_custom_call.1} parent=39 // pred_region
          %s246 = smul.u32 4, %s17
          %p247 = scmp.lt.s32.totalorder %s246, 7
          %s248 = scalar_select %p247, %s246, 7
          %s249 = smul.addr %s248, 8
          %s250 = scalar_lea.vmem %s0, %s249
          %s251 = smul.u32 4, %s17
        $region44: #{tpu_custom_call.1} parent=39 // pred_fallthru
          _
      $region40: #{tpu_custom_call.1} parent=5 // pred_fallthru
        _
      %p252 = scmp.le.s32.totalorder 1, %s17
      %p253 = scmp.lt.s32.totalorder %s17, 3
      %p254 = pnand %p252, %p253
      %p255 = pneg %p254
      // Predicated region
      $region45: #{tpu_custom_call.1} parent=5 // pred_check
        _
      $region46: #{tpu_custom_call.1} parent=5 // pred_check_branch
        %257 = sbr.rel (%p254) target = $region48
      $region47: #{tpu_custom_call.1} parent=5 // pred_region
        %s258 = ssub.s32 %s17, 1
        // Predicated region
        $region49: #{tpu_custom_call.1} parent=47 // pred_check
          %p259 = pneg %p148
        $region50: #{tpu_custom_call.1} parent=47 // pred_check_branch
          %261 = sbr.rel (%p259) target = $region52
        $region51: #{tpu_custom_call.1} parent=47 // pred_region
          %263 = dma.done [#allocation3], 1024
        $region52: #{tpu_custom_call.1} parent=47 // pred_fallthru
          _
        %s264 = smul.u32 4, %s22
        %p265 = scmp.lt.s32.totalorder %s264, 7
        %s266 = scalar_select %p265, %s264, 7
        %s267 = smul.addr %s266, 8
        %s268 = scalar_lea.vmem %s0, %s267
        %p269 = pneg %p43
        %p270 = pneg %p40
        %p271 = pneg %p64
        %p272 = pneg %p61
        %p273 = pneg %p85
        %p274 = pneg %p82
        %p275 = pneg %p106
        %p276 = pneg %p103
        %p277 = pneg %p127
        %p278 = pneg %p124
        %p279 = pneg %p148
        %p280 = pneg %p145
        %p281 = pneg %p169
        %p282 = pneg %p166
        %p283 = pneg %p195
        %p284 = pneg %p192
        %s285 = sand.u32 %s182, 1
        %s286 = scalar_lea.sflag [#allocation4], %s285
        %s287 = sand.u32 %s182, 1
        %s288 = smul.addr %s287, 16
        %s289 = scalar_lea.vmem [#allocation5], %s288
        %s290 = smul.u32 4, %s22
        %p291 = scmp.lt.s32.totalorder %s290, 7
        %s292 = scalar_select %p291, %s290, 7
        %s293 = smul.addr %s292, 8
        %s294 = scalar_lea.vmem %s0, %s293
        %s295 = smul.u32 4, %s22
        %s296 = smul.u32 4, %s22
        %v298 = vld [vmem:[%s294] sm:$0xff]
        %v299 = vld [vmem:[%s294 + $0x8] sm:$0xff]
        %v300 = vld [vmem:[%s294 + $0x10] sm:$0xff]
        %v301 = vld [vmem:[%s294 + $0x18] sm:$0xff]
        %v302 = vpack.c.bf16 %v299, %v298
        %v303 = vpack.c.bf16 %v301, %v300
        %v304 = vld [vmem:[%s1] sm:$0xf]
        %v305 = vld [vmem:[%s1 + $0x4] sm:$0xf]
        %v306 = vld [vmem:[%s1 + $0x8] sm:$0xf]
        %v307 = vld [vmem:[%s1 + $0xc] sm:$0xf]
        %v308 = vld [vmem:[%s2] sm:$0x1]
        %v310 = vperm.slane %v308, 0
        %v316 = vunpack.c.l.b16 %v304
        %v317 = vunpack.c.l.b16 %v305
        %v318 = vunpack.c.l.b16 %v306
        %v319 = vunpack.c.l.b16 %v307
        %v320 = vpack.c.b16 %v317, %v316
        %v321 = vpack.c.b16 %v319, %v318
        %vm324 = vcmask 261120
        %v326 = vsel %vm324, %v302, 0
        %v329 = vsel %vm324, %v303, 0
        %331 = vmatpush.bf16.msra.mxu0 0
        %332 = vmatpush.bf16.msra.mxu0 0
        %333 = vmatpush.bf16.msra.mxu0 0
        %334 = vmatpush.bf16.msra.mxu0 0
        %335 = vmatpush.bf16.msra.mxu0 0
        %336 = vmatpush.bf16.msra.mxu0 0
        %337 = vmatpush.bf16.msra.mxu0 %v321
        %338 = vmatpush.bf16.msra.mxu0 %v320
        %339 = vmatmul.bf16.gmra.mxu0 %v326
        %v340 = vpop.f32.mrf.mxu0
        %v341 = vadd.f32 %v310, %v340
        %v342 = vpop.f32.mrf.mxu0
        %v343 = vadd.f32 %v310, %v342
        %344 = vmatmul.bf16.gmra.mxu0 %v329
        %v345 = vpop.f32.mrf.mxu0
        %v346 = vadd.f32 %v310, %v345
        %v347 = vpop.f32.mrf.mxu0
        %v348 = vadd.f32 %v310, %v347
        %349 = vdwg.mxu0
        %v350 = vmax.f32 %v341, 0.0
        %v351 = vmax.f32 %v343, 0.0
        %v352 = vmax.f32 %v346, 0.0
        %v353 = vmax.f32 %v348, 0.0
        %v354 = vpack.c.bf16 %v351, %v350
        %v355 = vpack.c.bf16 %v353, %v352
        %v356 = vld [vmem:[%s3] sm:$0xf]
        %v357 = vld [vmem:[%s3 + $0x4] sm:$0xf]
        %v358 = vld [vmem:[%s3 + $0x8] sm:$0xf]
        %v359 = vld [vmem:[%s3 + $0xc] sm:$0xf]
        %v360 = vld [vmem:[%s3 + $0x10] sm:$0xf]
        %v361 = vld [vmem:[%s3 + $0x14] sm:$0xf]
        %v362 = vld [vmem:[%s3 + $0x18] sm:$0xf]
        %v363 = vld [vmem:[%s3 + $0x1c] sm:$0xf]
        %v364 = vld [vmem:[%s3 + $0x20] sm:$0xf]
        %v365 = vld [vmem:[%s3 + $0x24] sm:$0xf]
        %v366 = vld [vmem:[%s3 + $0x28] sm:$0xf]
        %v367 = vld [vmem:[%s3 + $0x2c] sm:$0xf]
        %v368 = vld [vmem:[%s3 + $0x30] sm:$0xf]
        %v369 = vld [vmem:[%s3 + $0x34] sm:$0xf]
        %v370 = vld [vmem:[%s3 + $0x38] sm:$0xf]
        %v371 = vld [vmem:[%s3 + $0x3c] sm:$0xf]
        %v372 = vld [vmem:[%s4] sm:$0x1]
        %v374 = vperm.slane %v372, 0
        %v392 = vunpack.c.l.b16 %v356
        %v393 = vunpack.c.l.b16 %v357
        %v394 = vunpack.c.l.b16 %v358
        %v395 = vunpack.c.l.b16 %v359
        %v396 = vunpack.c.l.b16 %v360
        %v397 = vunpack.c.l.b16 %v361
        %v398 = vunpack.c.l.b16 %v362
        %v399 = vunpack.c.l.b16 %v363
        %v400 = vunpack.c.l.b16 %v364
        %v401 = vunpack.c.l.b16 %v365
        %v402 = vunpack.c.l.b16 %v366
        %v403 = vunpack.c.l.b16 %v367
        %v404 = vunpack.c.l.b16 %v368
        %v405 = vunpack.c.l.b16 %v369
        %v406 = vunpack.c.l.b16 %v370
        %v407 = vunpack.c.l.b16 %v371
        %v408 = vpack.c.b16 %v393, %v392
        %v409 = vpack.c.b16 %v395, %v394
        %v410 = vpack.c.b16 %v397, %v396
        %v411 = vpack.c.b16 %v399, %v398
        %v412 = vpack.c.b16 %v401, %v400
        %v413 = vpack.c.b16 %v403, %v402
        %v414 = vpack.c.b16 %v405, %v404
        %v415 = vpack.c.b16 %v407, %v406
        %424 = vmatpush.bf16.msra.mxu0 %v415
        %425 = vmatpush.bf16.msra.mxu0 %v414
        %426 = vmatpush.bf16.msra.mxu0 %v413
        %427 = vmatpush.bf16.msra.mxu0 %v412
        %428 = vmatpush.bf16.msra.mxu0 %v411
        %429 = vmatpush.bf16.msra.mxu0 %v410
        %430 = vmatpush.bf16.msra.mxu0 %v409
        %431 = vmatpush.bf16.msra.mxu0 %v408
        %432 = vmatmul.bf16.gmra.mxu0 %v354
        %v433 = vpop.f32.mrf.mxu0
        %v434 = vadd.f32 %v374, %v433
        %v435 = vpop.f32.mrf.mxu0
        %v436 = vadd.f32 %v374, %v435
        %437 = vmatmul.bf16.gmra.mxu0 %v355
        %v438 = vpop.f32.mrf.mxu0
        %v439 = vadd.f32 %v374, %v438
        %v440 = vpop.f32.mrf.mxu0
        %v441 = vadd.f32 %v374, %v440
        %442 = vdwg.mxu0
        %v443 = vmax.f32 %v434, 0.0
        %v444 = vmax.f32 %v436, 0.0
        %v445 = vmax.f32 %v439, 0.0
        %v446 = vmax.f32 %v441, 0.0
        %v447 = vpack.c.bf16 %v444, %v443
        %v448 = vpack.c.bf16 %v446, %v445
        %v449 = vld [vmem:[#allocation2] sm:$0xf]
        %v450 = vld [vmem:[#allocation2 + $0x4] sm:$0xf]
        %v451 = vld [vmem:[#allocation2 + $0x8] sm:$0xf]
        %v452 = vld [vmem:[#allocation2 + $0xc] sm:$0xf]
        %v453 = vld [vmem:[#allocation2 + $0x10] sm:$0xf]
        %v454 = vld [vmem:[#allocation2 + $0x14] sm:$0xf]
        %v455 = vld [vmem:[#allocation2 + $0x18] sm:$0xf]
        %v456 = vld [vmem:[#allocation2 + $0x1c] sm:$0xf]
        %v457 = vld [vmem:[#allocation2 + $0x20] sm:$0xf]
        %v458 = vld [vmem:[#allocation2 + $0x24] sm:$0xf]
        %v459 = vld [vmem:[#allocation2 + $0x28] sm:$0xf]
        %v460 = vld [vmem:[#allocation2 + $0x2c] sm:$0xf]
        %v461 = vld [vmem:[#allocation2 + $0x30] sm:$0xf]
        %v462 = vld [vmem:[#allocation2 + $0x34] sm:$0xf]
        %v463 = vld [vmem:[#allocation2 + $0x38] sm:$0xf]
        %v464 = vld [vmem:[#allocation2 + $0x3c] sm:$0xf]
        %v465 = vld [vmem:[%s6] sm:$0x1]
        %v467 = vperm.slane %v465, 0
        %v485 = vunpack.c.l.b16 %v449
        %v486 = vunpack.c.l.b16 %v450
        %v487 = vunpack.c.l.b16 %v451
        %v488 = vunpack.c.l.b16 %v452
        %v489 = vunpack.c.l.b16 %v453
        %v490 = vunpack.c.l.b16 %v454
        %v491 = vunpack.c.l.b16 %v455
        %v492 = vunpack.c.l.b16 %v456
        %v493 = vunpack.c.l.b16 %v457
        %v494 = vunpack.c.l.b16 %v458
        %v495 = vunpack.c.l.b16 %v459
        %v496 = vunpack.c.l.b16 %v460
        %v497 = vunpack.c.l.b16 %v461
        %v498 = vunpack.c.l.b16 %v462
        %v499 = vunpack.c.l.b16 %v463
        %v500 = vunpack.c.l.b16 %v464
        %v501 = vpack.c.b16 %v486, %v485
        %v502 = vpack.c.b16 %v488, %v487
        %v503 = vpack.c.b16 %v490, %v489
        %v504 = vpack.c.b16 %v492, %v491
        %v505 = vpack.c.b16 %v494, %v493
        %v506 = vpack.c.b16 %v496, %v495
        %v507 = vpack.c.b16 %v498, %v497
        %v508 = vpack.c.b16 %v500, %v499
        %517 = vmatpush.bf16.msra.mxu0 %v508
        %518 = vmatpush.bf16.msra.mxu0 %v507
        %519 = vmatpush.bf16.msra.mxu0 %v506
        %520 = vmatpush.bf16.msra.mxu0 %v505
        %521 = vmatpush.bf16.msra.mxu0 %v504
        %522 = vmatpush.bf16.msra.mxu0 %v503
        %523 = vmatpush.bf16.msra.mxu0 %v502
        %524 = vmatpush.bf16.msra.mxu0 %v501
        %525 = vmatmul.bf16.gmra.mxu0 %v447
        %v526 = vpop.f32.mrf.mxu0
        %v527 = vadd.f32 %v467, %v526
        %v528 = vpop.f32.mrf.mxu0
        %v529 = vadd.f32 %v467, %v528
        %530 = vmatmul.bf16.gmra.mxu0 %v448
        %v531 = vpop.f32.mrf.mxu0
        %v532 = vadd.f32 %v467, %v531
        %v533 = vpop.f32.mrf.mxu0
        %v534 = vadd.f32 %v467, %v533
        %535 = vdwg.mxu0
        %v536 = vpack.c.bf16 %v527, %v527
        %v537 = vpack.c.bf16 %v529, %v529
        %v538 = vpack.c.bf16 %v532, %v532
        %v539 = vpack.c.bf16 %v534, %v534
        %540 = vst [vmem:[%s289] sm:$0xf] %v536
        %541 = vst [vmem:[%s289 + $0x4] sm:$0xf] %v537
        %542 = vst [vmem:[%s289 + $0x8] sm:$0xf] %v538
        %543 = vst [vmem:[%s289 + $0xc] sm:$0xf] %v539
        %s544 = sand.u32 %s182, 1
        %s545 = scalar_lea.sflag [#allocation4], %s544
        %s546 = sand.u32 %s182, 1
        %s547 = smul.addr %s546, 16
        %s548 = scalar_lea.vmem [#allocation5], %s547
        // Predicated region
        $region53: #{tpu_custom_call.1} parent=47 // pred_check
          %p549 = pneg %p192
        $region54: #{tpu_custom_call.1} parent=47 // pred_check_branch
          %551 = sbr.rel (%p549) target = $region56
        $region55: #{tpu_custom_call.1} parent=47 // pred_region
          %s552 = smul.u32 4, %s22
          %554 = vsyncadd %s545, 0
          %s555 = smul.addr %s552, 4
          %s556 = scalar_lea.hbm %s7, %s555
          %s557 = sshll.u32 %s548, 4
          %s558 = int_to_ptr.vmem [resolvable:$true] %s557
          %s559 = sshll.u32 %s556, 4
          %s560 = int_to_ptr.hbm [resolvable:$true] %s559
          %565 = dma.vmem_to_hbm [thread:$0]  %s558, 256, %s560, %s545, 64, 64, 4
        $region56: #{tpu_custom_call.1} parent=47 // pred_fallthru
          _
      $region48: #{tpu_custom_call.1} parent=5 // pred_fallthru
        _
      %p566 = scmp.le.s32.totalorder 2, %s17
      // Predicated region
      $region57: #{tpu_custom_call.1} parent=5 // pred_check
        %p567 = pneg %p566
      $region58: #{tpu_custom_call.1} parent=5 // pred_check_branch
        %569 = sbr.rel (%p567) target = $region60
      $region59: #{tpu_custom_call.1} parent=5 // pred_region
        %s570 = ssub.s32 %s17, 2
        // Predicated region
        $region61: #{tpu_custom_call.1} parent=59 // pred_check
          %p571 = pneg %p198
        $region62: #{tpu_custom_call.1} parent=59 // pred_check_branch
          %573 = sbr.rel (%p571) target = $region64
        $region63: #{tpu_custom_call.1} parent=59 // pred_region
          %s574 = sand.u32 %s183, 1
          %s575 = scalar_lea.sflag [#allocation4], %s574
          %s576 = sand.u32 %s183, 1
          %s577 = smul.addr %s576, 16
          %s578 = scalar_lea.vmem [#allocation5], %s577
          %580 = dma.done %s575, 256
        $region64: #{tpu_custom_call.1} parent=59 // pred_fallthru
          _
      $region60: #{tpu_custom_call.1} parent=5 // pred_fallthru
        _
    $region6: #{tpu_custom_call.1} parent=1 // loop_footer
      %s21 = sadd.s32 1, %s17
    $region7: #{tpu_custom_call.1} parent=1 // loop_footer_branch
      %16 = sbr.rel target = $region3
    $region8: #{tpu_custom_call.1} parent=1 // loop_exit
      _
    %581 = vsyncpa [#allocation3], 1
    %s582 = scalar_lea.sflag [#allocation3], 1
    %583 = vsyncpa %s582, 1
    %584 = vsyncpa [#allocation4], 1
    %s585 = scalar_lea.sflag [#allocation4], 1
    %586 = vsyncpa %s585, 1

</llo_original>
